<compile_context>
chip_gen: v5e
topology: v5e:2x2
jax: 0.10.0
libtpu: 0.0.40
codegen_flags: <defaults>
</compile_context>

<pallas_src>
import jax
import jax.numpy as jnp
from jax.experimental import pallas as pl
from jax.experimental.pallas import tpu as pltpu


# ----------------------------------------------------------------------------
# Fused kernel: 2x2 maxpool -> conv3x3+bias+ReLU -> conv3x3+bias+ReLU
# Grid: one step per batch element ("parallel" -> shards across TCs on v7x).
# ----------------------------------------------------------------------------
def _fused_unet_down_kernel(x_ref, w1_ref, b1_ref, w2_ref, b2_ref, o_ref):
    """Per-step shapes:
      x_ref : (1, Ho, 2, Wo, 2*Cin)   phase-split NHWC view of one batch elem
      w1_ref: (9*Cin, C1)             rows ordered (kh, kw, ci)
      b1_ref: (1, C1)
      w2_ref: (9*C1, C2)
      b2_ref: (1, C2)
      o_ref : (Ho*Wo, C2)             flat spatial-major output rows
    """
    _, ho, _, wo, two_cin = x_ref.shape
    cin = two_cin // 2

    # ---- 2x2 max-pool: two non-minor-dim slices + one lane-half split --------
    r0 = x_ref[:, :, 0, :, :]                       # rows h = 2*ho     (1,Ho,Wo,2Cin)
    r1 = x_ref[:, :, 1, :, :]                       # rows h = 2*ho + 1
    m = jnp.maximum(r0, r1)
    pooled = jnp.maximum(m[..., :cin], m[..., cin:])          # (1,Ho,Wo,Cin)

    # ---- conv3x3 (pad 1) + bias + ReLU as ONE MXU GEMM per conv --------------
    def conv3x3(act, w_ref, b_ref):
        n, hh, ww, c = act.shape
        # Zero border built as a VALUE (no VMEM scratch, no zero-fill stores).
        zc = jnp.zeros((n, hh, 1, c), act.dtype)
        t = jnp.concatenate([zc, act, zc], axis=2)            # (n, hh, ww+2, c)
        zr = jnp.zeros((n, 1, ww + 2, c), act.dtype)
        p = jnp.concatenate([zr, t, zr], axis=1)              # (n, hh+2, ww+2, c)
        # 9 shifted taps, stacked along the channel (lane) axis: (n,hh,ww,9c).
        taps = [p[:, kh:kh + hh, kw:kw + ww, :]
                for kh in range(3) for kw in range(3)]
        tap_mat = jnp.concatenate(taps, axis=3).reshape(n * hh * ww, 9 * c)
        # Single MXU contraction (K = 9*Cin), f32 accumulation.
        out = jnp.dot(tap_mat, w_ref[...], preferred_element_type=jnp.float32)
        return jnp.maximum(out + b_ref[...], 0.0)             # (n*hh*ww, c_out)

    c1 = w1_ref.shape[1]
    act1 = conv3x3(pooled, w1_ref, b1_ref).reshape(1, ho, wo, c1)
    act2 = conv3x3(act1, w2_ref, b2_ref)                      # (Ho*Wo, C2)
    o_ref[...] = act2.astype(o_ref.dtype)


# ----------------------------------------------------------------------------
# Wrapper: layout plumbing only.
# The NCHW<->NHWC transposes exist solely to honor the PyTorch NCHW interface;
# the reshapes (phase split, flat-output) are free.
# ----------------------------------------------------------------------------
@jax.jit
def unet_down_forward(x_nchw, w1, b1, w2, b2):
    n, cin, h, w = x_nchw.shape
    assert h % 2 == 0 and w % 2 == 0
    ho, wo = h // 2, w // 2
    c1 = w1.shape[0]
    c2 = w2.shape[0]

    x = jnp.transpose(x_nchw, (0, 2, 3, 1))                   # NCHW -> NHWC (interface)
    x5 = x.reshape(n, ho, 2, wo, 2 * cin)                     # free: split H, merge (2,C)
    w1f = jnp.transpose(w1, (2, 3, 1, 0)).reshape(9 * cin, c1)    # (kh,kw,ci) x co
    w2f = jnp.transpose(w2, (2, 3, 1, 0)).reshape(9 * c1, c2)
    b1f = b1.reshape(1, c1)
    b2f = b2.reshape(1, c2)

    out_flat = pl.pallas_call(
        _fused_unet_down_kernel,
        out_shape=jax.ShapeDtypeStruct((n * ho * wo, c2), x_nchw.dtype),
        grid=(n,),
        in_specs=[
            pl.BlockSpec((1, ho, 2, wo, 2 * cin), lambda i: (i, 0, 0, 0, 0)),
            pl.BlockSpec((9 * cin, c1), lambda i: (0, 0)),
            pl.BlockSpec((1, c1), lambda i: (0, 0)),
            pl.BlockSpec((9 * c1, c2), lambda i: (0, 0)),
            pl.BlockSpec((1, c2), lambda i: (0, 0)),
        ],
        out_specs=pl.BlockSpec((ho * wo, c2), lambda i: (i, 0)),
        compiler_params=pltpu.CompilerParams(
            dimension_semantics=("parallel",),          # v7x: one batch per TC
            vmem_limit_bytes=32 * 1024 * 1024,
        ),
    )(x5, w1f, b1f, w2f, b2f)

    out_nhwc = out_flat.reshape(n, ho, wo, c2)                 # free
    return jnp.transpose(out_nhwc, (0, 3, 1, 2))               # NHWC -> NCHW (interface)


# ----------------------------------------------------------------------------
# Pure-JAX reference (for correctness check)
# ----------------------------------------------------------------------------
def _ref_forward(x_nchw, w1, b1, w2, b2):
    x = jax.lax.reduce_window(
        x_nchw, -jnp.inf, jax.lax.max,
        window_dimensions=(1, 1, 2, 2), window_strides=(1, 1, 2, 2),
        padding="VALID",
    )

    def conv(x, w, b):
        y = jax.lax.conv_general_dilated(
            x, w, window_strides=(1, 1), padding=((1, 1), (1, 1)),
            dimension_numbers=("NCHW", "OIHW", "NCHW"),
        )
        return jax.nn.relu(y + b[None, :, None, None])

    x = conv(x, w1, b1)
    x = conv(x, w2, b2)
    return x


if __name__ == "__main__":
    key = jax.random.PRNGKey(0)
    kx, k1, k2, k3, k4 = jax.random.split(key, 5)

    N, Cin, H, W = 2, 4, 16, 16
    Cout = 8

    x = jax.random.normal(kx, (N, Cin, H, W), dtype=jnp.float32)

    # Deterministic PyTorch-style init (uniform +/- 1/sqrt(fan_in)).
    bound1 = 1.0 / (Cin * 9) ** 0.5
    w1 = jax.random.uniform(k1, (Cout, Cin, 3, 3), jnp.float32, -bound1, bound1)
    b1 = jax.random.uniform(k2, (Cout,), jnp.float32, -bound1, bound1)
    bound2 = 1.0 / (Cout * 9) ** 0.5
    w2 = jax.random.uniform(k3, (Cout, Cout, 3, 3), jnp.float32, -bound2, bound2)
    b2 = jax.random.uniform(k4, (Cout,), jnp.float32, -bound2, bound2)

    out = unet_down_forward(x, w1, b1, w2, b2)
    out = jax.block_until_ready(out)

    ref = _ref_forward(x, w1, b1, w2, b2)
    assert out.shape == (N, Cout, H // 2, W // 2), out.shape
    max_err = float(jnp.max(jnp.abs(out - ref)))
    assert jnp.allclose(out, ref, atol=1e-4, rtol=1e-4), max_err

    print("KERNEL_OK")
</pallas_src>

<mosaic_0001>
module attributes {stable_mosaic.version = 11 : i64} {
  func.func @_fused_unet_down_kernel(%arg0: i32, %arg1: memref<1x8x2x8x8xf32, #tpu.memory_space<vmem>>, %arg2: memref<36x8xf32, #tpu.memory_space<vmem>>, %arg3: memref<1x8xf32, #tpu.memory_space<vmem>>, %arg4: memref<72x8xf32, #tpu.memory_space<vmem>>, %arg5: memref<1x8xf32, #tpu.memory_space<vmem>>, %arg6: memref<64x8xf32, #tpu.memory_space<vmem>>) attributes {dimension_semantics = [#tpu.dimension_semantics<parallel>], iteration_bounds = array<i64: 2>, scalar_prefetch = 0 : i64, scratch_operands = 0 : i64, tpu.core_type = #tpu.core_type<tc>, window_params = [{transform_indices = @transform_0, window_bounds = array<i64: 1, 8, 2, 8, 8>}, {pipeline_mode = #tpu.pipeline_mode<synchronous>, transform_indices = @transform_1, window_bounds = array<i64: 36, 8>}, {pipeline_mode = #tpu.pipeline_mode<synchronous>, transform_indices = @transform_2, window_bounds = array<i64: 1, 8>}, {pipeline_mode = #tpu.pipeline_mode<synchronous>, transform_indices = @transform_3, window_bounds = array<i64: 72, 8>}, {pipeline_mode = #tpu.pipeline_mode<synchronous>, transform_indices = @transform_4, window_bounds = array<i64: 1, 8>}, {transform_indices = @transform_5, window_bounds = array<i64: 64, 8>}]} {
    %c0 = arith.constant 0 : index
    %c0_0 = arith.constant 0 : index
    %c0_1 = arith.constant 0 : index
    %c0_2 = arith.constant 0 : index
    %c0_3 = arith.constant 0 : index
    %0 = vector.load %arg1[%c0, %c0_0, %c0_1, %c0_2, %c0_3] : memref<1x8x2x8x8xf32, #tpu.memory_space<vmem>>, vector<1x8x1x8x8xf32>
    %1 = vector.shape_cast %0 : vector<1x8x1x8x8xf32> to vector<1x8x8x8xf32>
    %c0_4 = arith.constant 0 : index
    %c0_5 = arith.constant 0 : index
    %c1 = arith.constant 1 : index
    %c0_6 = arith.constant 0 : index
    %c0_7 = arith.constant 0 : index
    %2 = vector.load %arg1[%c0_4, %c0_5, %c1, %c0_6, %c0_7] : memref<1x8x2x8x8xf32, #tpu.memory_space<vmem>>, vector<1x8x1x8x8xf32>
    %3 = vector.shape_cast %2 : vector<1x8x1x8x8xf32> to vector<1x8x8x8xf32>
    %4 = arith.maximumf %1, %3 : vector<1x8x8x8xf32>
    %5 = vector.extract_strided_slice %4 {offsets = [0, 0, 0, 0], sizes = [1, 8, 8, 4], strides = [1, 1, 1, 1]} : vector<1x8x8x8xf32> to vector<1x8x8x4xf32>
    %6 = vector.extract_strided_slice %4 {offsets = [0, 0, 0, 4], sizes = [1, 8, 8, 4], strides = [1, 1, 1, 1]} : vector<1x8x8x8xf32> to vector<1x8x8x4xf32>
    %7 = arith.maximumf %5, %6 : vector<1x8x8x4xf32>
    %cst = arith.constant 0.000000e+00 : f32
    %8 = vector.broadcast %cst : f32 to vector<1x8x1x4xf32>
    %9 = tpu.concatenate %8, %7, %8 in 2 : vector<1x8x1x4xf32>, vector<1x8x8x4xf32>, vector<1x8x1x4xf32> -> vector<1x8x10x4xf32>
    %cst_8 = arith.constant 0.000000e+00 : f32
    %10 = vector.broadcast %cst_8 : f32 to vector<1x1x10x4xf32>
    %11 = tpu.concatenate %10, %9, %10 in 1 : vector<1x1x10x4xf32>, vector<1x8x10x4xf32>, vector<1x1x10x4xf32> -> vector<1x10x10x4xf32>
    %12 = vector.extract_strided_slice %11 {offsets = [0, 0, 0, 0], sizes = [1, 8, 8, 4], strides = [1, 1, 1, 1]} : vector<1x10x10x4xf32> to vector<1x8x8x4xf32>
    %13 = vector.extract_strided_slice %11 {offsets = [0, 0, 1, 0], sizes = [1, 8, 8, 4], strides = [1, 1, 1, 1]} : vector<1x10x10x4xf32> to vector<1x8x8x4xf32>
    %14 = vector.extract_strided_slice %11 {offsets = [0, 0, 2, 0], sizes = [1, 8, 8, 4], strides = [1, 1, 1, 1]} : vector<1x10x10x4xf32> to vector<1x8x8x4xf32>
    %15 = vector.extract_strided_slice %11 {offsets = [0, 1, 0, 0], sizes = [1, 8, 8, 4], strides = [1, 1, 1, 1]} : vector<1x10x10x4xf32> to vector<1x8x8x4xf32>
    %16 = vector.extract_strided_slice %11 {offsets = [0, 1, 1, 0], sizes = [1, 8, 8, 4], strides = [1, 1, 1, 1]} : vector<1x10x10x4xf32> to vector<1x8x8x4xf32>
    %17 = vector.extract_strided_slice %11 {offsets = [0, 1, 2, 0], sizes = [1, 8, 8, 4], strides = [1, 1, 1, 1]} : vector<1x10x10x4xf32> to vector<1x8x8x4xf32>
    %18 = vector.extract_strided_slice %11 {offsets = [0, 2, 0, 0], sizes = [1, 8, 8, 4], strides = [1, 1, 1, 1]} : vector<1x10x10x4xf32> to vector<1x8x8x4xf32>
    %19 = vector.extract_strided_slice %11 {offsets = [0, 2, 1, 0], sizes = [1, 8, 8, 4], strides = [1, 1, 1, 1]} : vector<1x10x10x4xf32> to vector<1x8x8x4xf32>
    %20 = vector.extract_strided_slice %11 {offsets = [0, 2, 2, 0], sizes = [1, 8, 8, 4], strides = [1, 1, 1, 1]} : vector<1x10x10x4xf32> to vector<1x8x8x4xf32>
    %21 = tpu.concatenate %12, %13, %14, %15, %16, %17, %18, %19, %20 in 3 : vector<1x8x8x4xf32>, vector<1x8x8x4xf32>, vector<1x8x8x4xf32>, vector<1x8x8x4xf32>, vector<1x8x8x4xf32>, vector<1x8x8x4xf32>, vector<1x8x8x4xf32>, vector<1x8x8x4xf32>, vector<1x8x8x4xf32> -> vector<1x8x8x36xf32>
    %22 = vector.shape_cast %21 : vector<1x8x8x36xf32> to vector<64x36xf32>
    %c0_9 = arith.constant 0 : index
    %c0_10 = arith.constant 0 : index
    %23 = vector.load %arg2[%c0_9, %c0_10] : memref<36x8xf32, #tpu.memory_space<vmem>>, vector<36x8xf32>
    %cst_11 = arith.constant dense<0.000000e+00> : vector<64x8xf32>
    %24 = tpu.matmul %22, %23, %cst_11 {dimension_numbers = #tpu.dot_dimension_numbers<[1], [0], [0], [1], [0, 0, 1, 1], [], []>} : vector<64x36xf32>, vector<36x8xf32>, vector<64x8xf32> -> vector<64x8xf32>
    %c0_12 = arith.constant 0 : index
    %c0_13 = arith.constant 0 : index
    %25 = vector.load %arg3[%c0_12, %c0_13] : memref<1x8xf32, #tpu.memory_space<vmem>>, vector<1x8xf32>
    %26 = vector.broadcast %25 : vector<1x8xf32> to vector<64x8xf32>
    %27 = arith.addf %24, %26 : vector<64x8xf32>
    %cst_14 = arith.constant 0.000000e+00 : f32
    %28 = vector.broadcast %cst_14 : f32 to vector<64x8xf32>
    %29 = arith.maximumf %27, %28 : vector<64x8xf32>
    %30 = vector.shape_cast %29 : vector<64x8xf32> to vector<1x8x8x8xf32>
    %cst_15 = arith.constant 0.000000e+00 : f32
    %31 = vector.broadcast %cst_15 : f32 to vector<1x8x1x8xf32>
    %32 = tpu.concatenate %31, %30, %31 in 2 : vector<1x8x1x8xf32>, vector<1x8x8x8xf32>, vector<1x8x1x8xf32> -> vector<1x8x10x8xf32>
    %cst_16 = arith.constant 0.000000e+00 : f32
    %33 = vector.broadcast %cst_16 : f32 to vector<1x1x10x8xf32>
    %34 = tpu.concatenate %33, %32, %33 in 1 : vector<1x1x10x8xf32>, vector<1x8x10x8xf32>, vector<1x1x10x8xf32> -> vector<1x10x10x8xf32>
    %35 = vector.extract_strided_slice %34 {offsets = [0, 0, 0, 0], sizes = [1, 8, 8, 8], strides = [1, 1, 1, 1]} : vector<1x10x10x8xf32> to vector<1x8x8x8xf32>
    %36 = vector.extract_strided_slice %34 {offsets = [0, 0, 1, 0], sizes = [1, 8, 8, 8], strides = [1, 1, 1, 1]} : vector<1x10x10x8xf32> to vector<1x8x8x8xf32>
    %37 = vector.extract_strided_slice %34 {offsets = [0, 0, 2, 0], sizes = [1, 8, 8, 8], strides = [1, 1, 1, 1]} : vector<1x10x10x8xf32> to vector<1x8x8x8xf32>
    %38 = vector.extract_strided_slice %34 {offsets = [0, 1, 0, 0], sizes = [1, 8, 8, 8], strides = [1, 1, 1, 1]} : vector<1x10x10x8xf32> to vector<1x8x8x8xf32>
    %39 = vector.extract_strided_slice %34 {offsets = [0, 1, 1, 0], sizes = [1, 8, 8, 8], strides = [1, 1, 1, 1]} : vector<1x10x10x8xf32> to vector<1x8x8x8xf32>
    %40 = vector.extract_strided_slice %34 {offsets = [0, 1, 2, 0], sizes = [1, 8, 8, 8], strides = [1, 1, 1, 1]} : vector<1x10x10x8xf32> to vector<1x8x8x8xf32>
    %41 = vector.extract_strided_slice %34 {offsets = [0, 2, 0, 0], sizes = [1, 8, 8, 8], strides = [1, 1, 1, 1]} : vector<1x10x10x8xf32> to vector<1x8x8x8xf32>
    %42 = vector.extract_strided_slice %34 {offsets = [0, 2, 1, 0], sizes = [1, 8, 8, 8], strides = [1, 1, 1, 1]} : vector<1x10x10x8xf32> to vector<1x8x8x8xf32>
    %43 = vector.extract_strided_slice %34 {offsets = [0, 2, 2, 0], sizes = [1, 8, 8, 8], strides = [1, 1, 1, 1]} : vector<1x10x10x8xf32> to vector<1x8x8x8xf32>
    %44 = tpu.concatenate %35, %36, %37, %38, %39, %40, %41, %42, %43 in 3 : vector<1x8x8x8xf32>, vector<1x8x8x8xf32>, vector<1x8x8x8xf32>, vector<1x8x8x8xf32>, vector<1x8x8x8xf32>, vector<1x8x8x8xf32>, vector<1x8x8x8xf32>, vector<1x8x8x8xf32>, vector<1x8x8x8xf32> -> vector<1x8x8x72xf32>
    %45 = vector.shape_cast %44 : vector<1x8x8x72xf32> to vector<64x72xf32>
    %c0_17 = arith.constant 0 : index
    %c0_18 = arith.constant 0 : index
    %46 = vector.load %arg4[%c0_17, %c0_18] : memref<72x8xf32, #tpu.memory_space<vmem>>, vector<72x8xf32>
    %cst_19 = arith.constant dense<0.000000e+00> : vector<64x8xf32>
    %47 = tpu.matmul %45, %46, %cst_19 {dimension_numbers = #tpu.dot_dimension_numbers<[1], [0], [0], [1], [0, 0, 1, 1], [], []>} : vector<64x72xf32>, vector<72x8xf32>, vector<64x8xf32> -> vector<64x8xf32>
    %c0_20 = arith.constant 0 : index
    %c0_21 = arith.constant 0 : index
    %48 = vector.load %arg5[%c0_20, %c0_21] : memref<1x8xf32, #tpu.memory_space<vmem>>, vector<1x8xf32>
    %49 = vector.broadcast %48 : vector<1x8xf32> to vector<64x8xf32>
    %50 = arith.addf %47, %49 : vector<64x8xf32>
    %cst_22 = arith.constant 0.000000e+00 : f32
    %51 = vector.broadcast %cst_22 : f32 to vector<64x8xf32>
    %52 = arith.maximumf %50, %51 : vector<64x8xf32>
    %c0_23 = arith.constant 0 : index
    %c0_24 = arith.constant 0 : index
    %53 = vector.load %arg6[%c0_23, %c0_24] : memref<64x8xf32, #tpu.memory_space<vmem>>, vector<64x8xf32>
    tpu.vector_store %arg6[%c0_23, %c0_24], %52 {strides = array<i32>} : memref<64x8xf32, #tpu.memory_space<vmem>>, vector<64x8xf32>,
    return
  }
  func.func @transform_0(%arg0: i32) -> (i32, i32, i32, i32, i32) {
    %c0_i32 = arith.constant 0 : i32
    %c0_i32_0 = arith.constant 0 : i32
    %c0_i32_1 = arith.constant 0 : i32
    %c0_i32_2 = arith.constant 0 : i32
    %c0_i32_3 = arith.constant 0 : i32
    return %arg0, %c0_i32, %c0_i32_0, %c0_i32_1, %c0_i32_2 : i32, i32, i32, i32, i32
  }
  func.func @transform_1(%arg0: i32) -> (i32, i32) {
    %c0_i32 = arith.constant 0 : i32
    %c0_i32_0 = arith.constant 0 : i32
    %c0_i32_1 = arith.constant 0 : i32
    return %c0_i32, %c0_i32_0 : i32, i32
  }
  func.func @transform_2(%arg0: i32) -> (i32, i32) {
    %c0_i32 = arith.constant 0 : i32
    %c0_i32_0 = arith.constant 0 : i32
    %c0_i32_1 = arith.constant 0 : i32
    return %c0_i32, %c0_i32_0 : i32, i32
  }
  func.func @transform_3(%arg0: i32) -> (i32, i32) {
    %c0_i32 = arith.constant 0 : i32
    %c0_i32_0 = arith.constant 0 : i32
    %c0_i32_1 = arith.constant 0 : i32
    return %c0_i32, %c0_i32_0 : i32, i32
  }
  func.func @transform_4(%arg0: i32) -> (i32, i32) {
    %c0_i32 = arith.constant 0 : i32
    %c0_i32_0 = arith.constant 0 : i32
    %c0_i32_1 = arith.constant 0 : i32
    return %c0_i32, %c0_i32_0 : i32, i32
  }
  func.func @transform_5(%arg0: i32) -> (i32, i32) {
    %c0_i32 = arith.constant 0 : i32
    %c0_i32_0 = arith.constant 0 : i32
    return %arg0, %c0_i32 : i32, i32
  }
}

</mosaic_0001>

<llo_original>
// kernel: unet_down_forward.1
$region0: #{unet_down_forward.1}
  #allocation0 [shape = 'u32[]', space=smem, size = 0x4, offset = 0x4, fixed_abs, tag = 'smem constant byte address 0x4 - core index']
  #allocation1 [shape = 'u32[72,128]{1,0:T(1,128)}', space=vmem, size = 0x9000, scoped, tag = 'internal scratch']
  %s0 = inlined_call_operand.vmem [shape: f32[2,8,2,8,8], index: 0, kind: input, shape index: {}]
  %s1 = inlined_call_operand.vmem [shape: f32[36,8], index: 1, kind: input, shape index: {}]
  %s2 = inlined_call_operand.vmem [shape: f32[1,8], index: 2, kind: input, shape index: {}]
  %s3 = inlined_call_operand.vmem [shape: f32[72,8], index: 3, kind: input, shape index: {}]
  %s4 = inlined_call_operand.vmem [shape: f32[1,8], index: 4, kind: input, shape index: {}]
  %s5 = inlined_call_operand.vmem [shape: f32[128,8], index: 5, kind: output, shape index: {}]
  %s6 = sld [smem:[#allocation0]]
  $region53: #{unet_down_forward.1} parent=0
    _
  %s8 = ssub.s32 1, %s6
  %s9 = scalar_select 0, %s8, %s6
  loop: start=0, step=1, limit=4
  $region2: #{unet_down_forward.1} parent=0 // loop_pre_header
    _
  $region3: #{unet_down_forward.1} parent=0 // loop_header
    %s11 = sphi 0, %s15
    %p12 = scmp.ge.s32.totalorder %s11, 4
    %s21 = sphi 0, %s23
    %s24 = sphi 0, %s21
    %s25 = sphi 0, %s24
    %s41 = sphi 0, %s25
    %s45 = sphi 0, %s45
    %s47 = sphi 0, %s45
    %s48 = sphi 0, %s47
    %s62 = sphi 0, %s48
    %s66 = sphi 0, %s66
    %s68 = sphi 0, %s66
    %s69 = sphi 0, %s68
    %s83 = sphi 0, %s69
    %s87 = sphi 0, %s87
    %s89 = sphi 0, %s87
    %s90 = sphi 0, %s89
    %s104 = sphi 0, %s90
    %s108 = sphi 0, %s108
    %s110 = sphi 0, %s108
    %s111 = sphi 0, %s110
    %s125 = sphi 0, %s111
    %s131 = sphi 0, %s133
    %s134 = sphi 0, %s131
    %s135 = sphi 0, %s134
    %s151 = sphi 0, %s135
  $region4: #{unet_down_forward.1} parent=0 // loop_header_branch
    %14 = sbr.rel (%p12) target = $region8
  $region5: #{unet_down_forward.1} parent=0 // loop_body
    %s16 = ssub.s32 %s11, 1
    %s17 = ssub.s32 %s11, 2
    %s18 = sadd.s32 %s11, 1
    %s19 = ssub.s32 %s11, %s18
    %p20 = scmp.eq.s32.totalorder %s19, 0
    %s22 = sadd.s32 %s21, 1
    %s23 = scalar_select %p20, %s21, %s22
    %p26 = pneg %p20
    %p27 = scmp.eq.s32.totalorder %s11, 1
    %p28 = por %p26, %p27
    %p29 = scmp.ne.s32.totalorder %s21, %s24
    %p30 = scmp.eq.s32.totalorder %s11, 0
    %p31 = por %p29, %p30
    %p32 = scmp.ne.s32.totalorder %s21, %s24
    %p33 = scmp.eq.s32.totalorder %s16, 1
    %p34 = por %p32, %p33
    %p35 = scmp.ne.s32.totalorder %s24, %s25
    %p36 = scmp.eq.s32.totalorder %s16, 0
    %p37 = por %p35, %p36
    %p38 = scmp.ne.s32.totalorder %s24, %s25
    %p39 = scmp.eq.s32.totalorder %s17, 1
    %p40 = por %p38, %p39
    %p42 = scmp.ne.s32.totalorder %s25, %s41
    %p43 = scmp.eq.s32.totalorder %s17, 0
    %p44 = por %p42, %p43
    %s46 = sadd.s32 %s45, 1
    %p49 = scmp.eq.s32.totalorder %s11, 1
    %p50 = scmp.ne.s32.totalorder %s45, %s47
    %p51 = scmp.eq.s32.totalorder %s11, 0
    %p52 = por %p50, %p51
    %p53 = scmp.ne.s32.totalorder %s45, %s47
    %p54 = scmp.eq.s32.totalorder %s16, 1
    %p55 = por %p53, %p54
    %p56 = scmp.ne.s32.totalorder %s47, %s48
    %p57 = scmp.eq.s32.totalorder %s16, 0
    %p58 = por %p56, %p57
    %p59 = scmp.ne.s32.totalorder %s47, %s48
    %p60 = scmp.eq.s32.totalorder %s17, 1
    %p61 = por %p59, %p60
    %p63 = scmp.ne.s32.totalorder %s48, %s62
    %p64 = scmp.eq.s32.totalorder %s17, 0
    %p65 = por %p63, %p64
    %s67 = sadd.s32 %s66, 1
    %p70 = scmp.eq.s32.totalorder %s11, 1
    %p71 = scmp.ne.s32.totalorder %s66, %s68
    %p72 = scmp.eq.s32.totalorder %s11, 0
    %p73 = por %p71, %p72
    %p74 = scmp.ne.s32.totalorder %s66, %s68
    %p75 = scmp.eq.s32.totalorder %s16, 1
    %p76 = por %p74, %p75
    %p77 = scmp.ne.s32.totalorder %s68, %s69
    %p78 = scmp.eq.s32.totalorder %s16, 0
    %p79 = por %p77, %p78
    %p80 = scmp.ne.s32.totalorder %s68, %s69
    %p81 = scmp.eq.s32.totalorder %s17, 1
    %p82 = por %p80, %p81
    %p84 = scmp.ne.s32.totalorder %s69, %s83
    %p85 = scmp.eq.s32.totalorder %s17, 0
    %p86 = por %p84, %p85
    %s88 = sadd.s32 %s87, 1
    %p91 = scmp.eq.s32.totalorder %s11, 1
    %p92 = scmp.ne.s32.totalorder %s87, %s89
    %p93 = scmp.eq.s32.totalorder %s11, 0
    %p94 = por %p92, %p93
    %p95 = scmp.ne.s32.totalorder %s87, %s89
    %p96 = scmp.eq.s32.totalorder %s16, 1
    %p97 = por %p95, %p96
    %p98 = scmp.ne.s32.totalorder %s89, %s90
    %p99 = scmp.eq.s32.totalorder %s16, 0
    %p100 = por %p98, %p99
    %p101 = scmp.ne.s32.totalorder %s89, %s90
    %p102 = scmp.eq.s32.totalorder %s17, 1
    %p103 = por %p101, %p102
    %p105 = scmp.ne.s32.totalorder %s90, %s104
    %p106 = scmp.eq.s32.totalorder %s17, 0
    %p107 = por %p105, %p106
    %s109 = sadd.s32 %s108, 1
    %p112 = scmp.eq.s32.totalorder %s11, 1
    %p113 = scmp.ne.s32.totalorder %s108, %s110
    %p114 = scmp.eq.s32.totalorder %s11, 0
    %p115 = por %p113, %p114
    %p116 = scmp.ne.s32.totalorder %s108, %s110
    %p117 = scmp.eq.s32.totalorder %s16, 1
    %p118 = por %p116, %p117
    %p119 = scmp.ne.s32.totalorder %s110, %s111
    %p120 = scmp.eq.s32.totalorder %s16, 0
    %p121 = por %p119, %p120
    %p122 = scmp.ne.s32.totalorder %s110, %s111
    %p123 = scmp.eq.s32.totalorder %s17, 1
    %p124 = por %p122, %p123
    %p126 = scmp.ne.s32.totalorder %s111, %s125
    %p127 = scmp.eq.s32.totalorder %s17, 0
    %p128 = por %p126, %p127
    %s129 = ssub.s32 %s11, %s18
    %p130 = scmp.eq.s32.totalorder %s129, 0
    %s132 = sadd.s32 %s131, 1
    %s133 = scalar_select %p130, %s131, %s132
    %p136 = pneg %p130
    %p137 = scmp.eq.s32.totalorder %s11, 1
    %p138 = por %p136, %p137
    %p139 = scmp.ne.s32.totalorder %s131, %s134
    %p140 = scmp.eq.s32.totalorder %s11, 0
    %p141 = por %p139, %p140
    %p142 = scmp.ne.s32.totalorder %s131, %s134
    %p143 = scmp.eq.s32.totalorder %s16, 1
    %p144 = por %p142, %p143
    %p145 = scmp.ne.s32.totalorder %s134, %s135
    %p146 = scmp.eq.s32.totalorder %s16, 0
    %p147 = por %p145, %p146
    %p148 = scmp.ne.s32.totalorder %s134, %s135
    %p149 = scmp.eq.s32.totalorder %s17, 1
    %p150 = por %p148, %p149
    %p152 = scmp.ne.s32.totalorder %s135, %s151
    %p153 = scmp.eq.s32.totalorder %s17, 0
    %p154 = por %p152, %p153
    %p155 = scmp.le.s32.totalorder 1, %s11
    %p156 = scmp.lt.s32.totalorder %s11, 3
    %p157 = pnand %p155, %p156
    %p158 = pneg %p157
    // Predicated region
    $region9: #{unet_down_forward.1} parent=5 // pred_check
      _
    $region10: #{unet_down_forward.1} parent=5 // pred_check_branch
      %160 = sbr.rel (%p157) target = $region12
    $region11: #{unet_down_forward.1} parent=5 // pred_region
      %s161 = ssub.s32 %s11, 1
      // Predicated region
      $region13: #{unet_down_forward.1} parent=11 // pred_check
        %p162 = pneg %p58
      $region14: #{unet_down_forward.1} parent=11 // pred_check_branch
        %164 = sbr.rel (%p162) target = $region16
      $region15: #{unet_down_forward.1} parent=11 // pred_region
        _
      $region16: #{unet_down_forward.1} parent=11 // pred_fallthru
        _
      // Predicated region
      $region17: #{unet_down_forward.1} parent=11 // pred_check
        %p165 = pneg %p79
      $region18: #{unet_down_forward.1} parent=11 // pred_check_branch
        %167 = sbr.rel (%p165) target = $region20
      $region19: #{unet_down_forward.1} parent=11 // pred_region
        _
      $region20: #{unet_down_forward.1} parent=11 // pred_fallthru
        _
      // Predicated region
      $region21: #{unet_down_forward.1} parent=11 // pred_check
        %p168 = pneg %p100
      $region22: #{unet_down_forward.1} parent=11 // pred_check_branch
        %170 = sbr.rel (%p168) target = $region24
      $region23: #{unet_down_forward.1} parent=11 // pred_region
        _
      $region24: #{unet_down_forward.1} parent=11 // pred_fallthru
        _
      // Predicated region
      $region25: #{unet_down_forward.1} parent=11 // pred_check
        %p171 = pneg %p121
      $region26: #{unet_down_forward.1} parent=11 // pred_check_branch
        %173 = sbr.rel (%p171) target = $region28
      $region27: #{unet_down_forward.1} parent=11 // pred_region
        _
      $region28: #{unet_down_forward.1} parent=11 // pred_fallthru
        _
    $region12: #{unet_down_forward.1} parent=5 // pred_fallthru
      _
    %p174 = scmp.lt.s32.totalorder %s11, 2
    // Predicated region
    $region29: #{unet_down_forward.1} parent=5 // pred_check
      %p175 = pneg %p174
    $region30: #{unet_down_forward.1} parent=5 // pred_check_branch
      %177 = sbr.rel (%p175) target = $region32
    $region31: #{unet_down_forward.1} parent=5 // pred_region
      // Predicated region
      $region33: #{unet_down_forward.1} parent=31 // pred_check
        %p178 = pneg %p31
      $region34: #{unet_down_forward.1} parent=31 // pred_check_branch
        %180 = sbr.rel (%p178) target = $region36
      $region35: #{unet_down_forward.1} parent=31 // pred_region
        %p181 = scmp.lt.s32.totalorder %s11, 1
        %s182 = scalar_select %p181, %s11, 1
        %s183 = smul.addr %s182, 16
        %s184 = smul.addr %s183, 8
        %s185 = scalar_lea.vmem %s0, %s184
      $region36: #{unet_down_forward.1} parent=31 // pred_fallthru
        _
    $region32: #{unet_down_forward.1} parent=5 // pred_fallthru
      _
    %p186 = scmp.le.s32.totalorder 1, %s11
    %p187 = scmp.lt.s32.totalorder %s11, 3
    %p188 = pnand %p186, %p187
    %p189 = pneg %p188
    // Predicated region
    $region37: #{unet_down_forward.1} parent=5 // pred_check
      _
    $region38: #{unet_down_forward.1} parent=5 // pred_check_branch
      %191 = sbr.rel (%p188) target = $region40
    $region39: #{unet_down_forward.1} parent=5 // pred_region
      %s192 = ssub.s32 %s11, 1
      %p193 = scmp.lt.s32.totalorder %s16, 1
      %s194 = scalar_select %p193, %s16, 1
      %s195 = smul.addr %s194, 16
      %s196 = smul.addr %s195, 8
      %s197 = scalar_lea.vmem %s0, %s196
      %p198 = pneg %p37
      %p199 = pneg %p34
      %p200 = pneg %p58
      %p201 = pneg %p55
      %p202 = pneg %p79
      %p203 = pneg %p76
      %p204 = pneg %p100
      %p205 = pneg %p97
      %p206 = pneg %p121
      %p207 = pneg %p118
      %p208 = pneg %p147
      %p209 = pneg %p144
      %s210 = smul.u32 8, %s16
      %p211 = scmp.lt.s32.totalorder %s210, 15
      %s212 = scalar_select %p211, %s210, 15
      %s213 = smul.addr %s212, 8
      %s214 = scalar_lea.vmem %s5, %s213
      %p215 = scmp.lt.s32.totalorder %s16, 1
      %s216 = scalar_select %p215, %s16, 1
      %s217 = smul.addr %s216, 16
      %s218 = smul.addr %s217, 8
      %s219 = scalar_lea.vmem %s0, %s218
      %s220 = smul.u32 8, %s16
      %p221 = scmp.lt.s32.totalorder %s220, 15
      %s222 = scalar_select %p221, %s220, 15
      %s223 = smul.addr %s222, 8
      %s224 = scalar_lea.vmem %s5, %s223
      %s225 = smul.u32 8, %s16
      %v226 = vld [vmem:[%s219] sm:$0xff]
      %v227 = vld [vmem:[%s219 + $0x10] sm:$0xff]
      %v228 = vld [vmem:[%s219 + $0x20] sm:$0xff]
      %v229 = vld [vmem:[%s219 + $0x30] sm:$0xff]
      %v230 = vld [vmem:[%s219 + $0x40] sm:$0xff]
      %v231 = vld [vmem:[%s219 + $0x50] sm:$0xff]
      %v232 = vld [vmem:[%s219 + $0x60] sm:$0xff]
      %v233 = vld [vmem:[%s219 + $0x70] sm:$0xff]
      %s234 = scalar_lea.vmem %s219, 8
      %v235 = vld [vmem:[%s234] sm:$0xff]
      %v236 = vld [vmem:[%s234 + $0x10] sm:$0xff]
      %v237 = vld [vmem:[%s234 + $0x20] sm:$0xff]
      %v238 = vld [vmem:[%s234 + $0x30] sm:$0xff]
      %v239 = vld [vmem:[%s234 + $0x40] sm:$0xff]
      %v240 = vld [vmem:[%s234 + $0x50] sm:$0xff]
      %v241 = vld [vmem:[%s234 + $0x60] sm:$0xff]
      %v242 = vld [vmem:[%s234 + $0x70] sm:$0xff]
      %v243 = vmax.f32 %v226, %v235
      %v244 = vmax.f32 %v227, %v236
      %v245 = vmax.f32 %v228, %v237
      %v246 = vmax.f32 %v229, %v238
      %v247 = vmax.f32 %v230, %v239
      %v248 = vmax.f32 %v231, %v240
      %v249 = vmax.f32 %v232, %v241
      %v250 = vmax.f32 %v233, %v242
      %259 = vrot.lane.b32.xlu0 %v243, 124
      %v260 = vpop.permute.xlu0 %259
      %261 = vrot.lane.b32.xlu0 %v244, 124
      %v262 = vpop.permute.xlu0 %261
      %263 = vrot.lane.b32.xlu0 %v245, 124
      %v264 = vpop.permute.xlu0 %263
      %265 = vrot.lane.b32.xlu0 %v246, 124
      %v266 = vpop.permute.xlu0 %265
      %267 = vrot.lane.b32.xlu0 %v247, 124
      %v268 = vpop.permute.xlu0 %267
      %269 = vrot.lane.b32.xlu0 %v248, 124
      %v270 = vpop.permute.xlu0 %269
      %271 = vrot.lane.b32.xlu0 %v249, 124
      %v272 = vpop.permute.xlu0 %271
      %273 = vrot.lane.b32.xlu0 %v250, 124
      %v274 = vpop.permute.xlu0 %273
      %v283 = vmax.f32 %v243, %v260
      %v284 = vmax.f32 %v244, %v262
      %v285 = vmax.f32 %v245, %v264
      %v286 = vmax.f32 %v246, %v266
      %v287 = vmax.f32 %v247, %v268
      %v288 = vmax.f32 %v248, %v270
      %v289 = vmax.f32 %v249, %v272
      %v290 = vmax.f32 %v250, %v274
      %v299 = vrot.slane %v283, 7
      %v300 = vrot.slane %v284, 7
      %v301 = vrot.slane %v285, 7
      %v302 = vrot.slane %v286, 7
      %v303 = vrot.slane %v287, 7
      %v304 = vrot.slane %v288, 7
      %v305 = vrot.slane %v289, 7
      %v306 = vrot.slane %v290, 7
      %vm315 = vcmask 1040384
      %v316 = vsel %vm315, 0.0, %v299
      %v317 = vsel %vm315, 0.0, %v300
      %v318 = vsel %vm315, 0.0, %v301
      %v319 = vsel %vm315, 0.0, %v302
      %v320 = vsel %vm315, 0.0, %v303
      %v321 = vsel %vm315, 0.0, %v304
      %v322 = vsel %vm315, 0.0, %v305
      %v323 = vsel %vm315, 0.0, %v306
      %v324 = vsel %vm315, %v299, 0.0
      %v325 = vsel %vm315, %v300, 0.0
      %v326 = vsel %vm315, %v301, 0.0
      %v327 = vsel %vm315, %v302, 0.0
      %v328 = vsel %vm315, %v303, 0.0
      %v329 = vsel %vm315, %v304, 0.0
      %v330 = vsel %vm315, %v305, 0.0
      %v331 = vsel %vm315, %v306, 0.0
      %vm347 = vcmask 1046528
      %v348 = vrot.slane 0.0, 1
      %v349 = vsel %vm347, %v348, %v348
      %v350 = vrot.slane %v316, 1
      %v351 = vrot.slane %v324, 1
      %v352 = vsel %vm347, %v350, %v351
      %v353 = vrot.slane %v317, 1
      %v354 = vrot.slane %v325, 1
      %v355 = vsel %vm347, %v353, %v354
      %v356 = vrot.slane %v318, 1
      %v357 = vrot.slane %v326, 1
      %v358 = vsel %vm347, %v356, %v357
      %v359 = vrot.slane %v319, 1
      %v360 = vrot.slane %v327, 1
      %v361 = vsel %vm347, %v359, %v360
      %v362 = vrot.slane %v320, 1
      %v363 = vrot.slane %v328, 1
      %v364 = vsel %vm347, %v362, %v363
      %v365 = vrot.slane %v321, 1
      %v366 = vrot.slane %v329, 1
      %v367 = vsel %vm347, %v365, %v366
      %v368 = vrot.slane %v322, 1
      %v369 = vrot.slane %v330, 1
      %v370 = vsel %vm347, %v368, %v369
      %371 = vrot.lane.b32.xlu0 %v349, 4
      %v372 = vpop.permute.xlu0 %371
      %373 = vrot.lane.b32.xlu0 %v352, 4
      %v374 = vpop.permute.xlu0 %373
      %375 = vrot.lane.b32.xlu0 %v355, 4
      %v376 = vpop.permute.xlu0 %375
      %377 = vrot.lane.b32.xlu0 %v358, 4
      %v378 = vpop.permute.xlu0 %377
      %379 = vrot.lane.b32.xlu0 %v361, 4
      %v380 = vpop.permute.xlu0 %379
      %381 = vrot.lane.b32.xlu0 %v364, 4
      %v382 = vpop.permute.xlu0 %381
      %383 = vrot.lane.b32.xlu0 %v367, 4
      %v384 = vpop.permute.xlu0 %383
      %385 = vrot.lane.b32.xlu0 %v370, 4
      %v386 = vpop.permute.xlu0 %385
      %vm395 = vcmask 1045504
      %v396 = vrot.slane 0.0, 2
      %v397 = vsel %vm395, %v396, %v396
      %v398 = vrot.slane %v316, 2
      %v399 = vrot.slane %v324, 2
      %v400 = vsel %vm395, %v398, %v399
      %v401 = vrot.slane %v317, 2
      %v402 = vrot.slane %v325, 2
      %v403 = vsel %vm395, %v401, %v402
      %v404 = vrot.slane %v318, 2
      %v405 = vrot.slane %v326, 2
      %v406 = vsel %vm395, %v404, %v405
      %v407 = vrot.slane %v319, 2
      %v408 = vrot.slane %v327, 2
      %v409 = vsel %vm395, %v407, %v408
      %v410 = vrot.slane %v320, 2
      %v411 = vrot.slane %v328, 2
      %v412 = vsel %vm395, %v410, %v411
      %v413 = vrot.slane %v321, 2
      %v414 = vrot.slane %v329, 2
      %v415 = vsel %vm395, %v413, %v414
      %v416 = vrot.slane %v322, 2
      %v417 = vrot.slane %v330, 2
      %v418 = vsel %vm395, %v416, %v417
      %419 = vrot.lane.b32.xlu0 %v397, 8
      %v420 = vpop.permute.xlu0 %419
      %421 = vrot.lane.b32.xlu0 %v400, 8
      %v422 = vpop.permute.xlu0 %421
      %423 = vrot.lane.b32.xlu0 %v403, 8
      %v424 = vpop.permute.xlu0 %423
      %425 = vrot.lane.b32.xlu0 %v406, 8
      %v426 = vpop.permute.xlu0 %425
      %427 = vrot.lane.b32.xlu0 %v409, 8
      %v428 = vpop.permute.xlu0 %427
      %429 = vrot.lane.b32.xlu0 %v412, 8
      %v430 = vpop.permute.xlu0 %429
      %431 = vrot.lane.b32.xlu0 %v415, 8
      %v432 = vpop.permute.xlu0 %431
      %433 = vrot.lane.b32.xlu0 %v418, 8
      %v434 = vpop.permute.xlu0 %433
      %444 = vrot.lane.b32.xlu0 %v316, 12
      %v445 = vpop.permute.xlu0 %444
      %446 = vrot.lane.b32.xlu0 %v317, 12
      %v447 = vpop.permute.xlu0 %446
      %448 = vrot.lane.b32.xlu0 %v318, 12
      %v449 = vpop.permute.xlu0 %448
      %450 = vrot.lane.b32.xlu0 %v319, 12
      %v451 = vpop.permute.xlu0 %450
      %452 = vrot.lane.b32.xlu0 %v320, 12
      %v453 = vpop.permute.xlu0 %452
      %454 = vrot.lane.b32.xlu0 %v321, 12
      %v455 = vpop.permute.xlu0 %454
      %456 = vrot.lane.b32.xlu0 %v322, 12
      %v457 = vpop.permute.xlu0 %456
      %458 = vrot.lane.b32.xlu0 %v323, 12
      %v459 = vpop.permute.xlu0 %458
      %v469 = vrot.slane %v323, 1
      %v470 = vrot.slane %v331, 1
      %v471 = vsel %vm347, %v469, %v470
      %472 = vrot.lane.b32.xlu0 %v352, 16
      %v473 = vpop.permute.xlu0 %472
      %474 = vrot.lane.b32.xlu0 %v355, 16
      %v475 = vpop.permute.xlu0 %474
      %476 = vrot.lane.b32.xlu0 %v358, 16
      %v477 = vpop.permute.xlu0 %476
      %478 = vrot.lane.b32.xlu0 %v361, 16
      %v479 = vpop.permute.xlu0 %478
      %480 = vrot.lane.b32.xlu0 %v364, 16
      %v481 = vpop.permute.xlu0 %480
      %482 = vrot.lane.b32.xlu0 %v367, 16
      %v483 = vpop.permute.xlu0 %482
      %484 = vrot.lane.b32.xlu0 %v370, 16
      %v485 = vpop.permute.xlu0 %484
      %486 = vrot.lane.b32.xlu0 %v471, 16
      %v487 = vpop.permute.xlu0 %486
      %v496 = vrot.slane %v323, 2
      %v497 = vrot.slane %v331, 2
      %v498 = vsel %vm395, %v496, %v497
      %499 = vrot.lane.b32.xlu0 %v400, 20
      %v500 = vpop.permute.xlu0 %499
      %501 = vrot.lane.b32.xlu0 %v403, 20
      %v502 = vpop.permute.xlu0 %501
      %503 = vrot.lane.b32.xlu0 %v406, 20
      %v504 = vpop.permute.xlu0 %503
      %505 = vrot.lane.b32.xlu0 %v409, 20
      %v506 = vpop.permute.xlu0 %505
      %507 = vrot.lane.b32.xlu0 %v412, 20
      %v508 = vpop.permute.xlu0 %507
      %509 = vrot.lane.b32.xlu0 %v415, 20
      %v510 = vpop.permute.xlu0 %509
      %511 = vrot.lane.b32.xlu0 %v418, 20
      %v512 = vpop.permute.xlu0 %511
      %513 = vrot.lane.b32.xlu0 %v498, 20
      %v514 = vpop.permute.xlu0 %513
      %523 = vrot.lane.b32.xlu0 %v317, 24
      %v524 = vpop.permute.xlu0 %523
      %525 = vrot.lane.b32.xlu0 %v318, 24
      %v526 = vpop.permute.xlu0 %525
      %527 = vrot.lane.b32.xlu0 %v319, 24
      %v528 = vpop.permute.xlu0 %527
      %529 = vrot.lane.b32.xlu0 %v320, 24
      %v530 = vpop.permute.xlu0 %529
      %531 = vrot.lane.b32.xlu0 %v321, 24
      %v532 = vpop.permute.xlu0 %531
      %533 = vrot.lane.b32.xlu0 %v322, 24
      %v534 = vpop.permute.xlu0 %533
      %535 = vrot.lane.b32.xlu0 %v323, 24
      %v536 = vpop.permute.xlu0 %535
      %537 = vrot.lane.b32.xlu0 0.0, 24
      %v538 = vpop.permute.xlu0 %537
      %547 = vrot.lane.b32.xlu0 %v355, 28
      %v548 = vpop.permute.xlu0 %547
      %549 = vrot.lane.b32.xlu0 %v358, 28
      %v550 = vpop.permute.xlu0 %549
      %551 = vrot.lane.b32.xlu0 %v361, 28
      %v552 = vpop.permute.xlu0 %551
      %553 = vrot.lane.b32.xlu0 %v364, 28
      %v554 = vpop.permute.xlu0 %553
      %555 = vrot.lane.b32.xlu0 %v367, 28
      %v556 = vpop.permute.xlu0 %555
      %557 = vrot.lane.b32.xlu0 %v370, 28
      %v558 = vpop.permute.xlu0 %557
      %559 = vrot.lane.b32.xlu0 %v471, 28
      %v560 = vpop.permute.xlu0 %559
      %561 = vrot.lane.b32.xlu0 %v349, 28
      %v562 = vpop.permute.xlu0 %561
      %571 = vrot.lane.b32.xlu0 %v403, 32
      %v572 = vpop.permute.xlu0 %571
      %573 = vrot.lane.b32.xlu0 %v406, 32
      %v574 = vpop.permute.xlu0 %573
      %575 = vrot.lane.b32.xlu0 %v409, 32
      %v576 = vpop.permute.xlu0 %575
      %577 = vrot.lane.b32.xlu0 %v412, 32
      %v578 = vpop.permute.xlu0 %577
      %579 = vrot.lane.b32.xlu0 %v415, 32
      %v580 = vpop.permute.xlu0 %579
      %581 = vrot.lane.b32.xlu0 %v418, 32
      %v582 = vpop.permute.xlu0 %581
      %583 = vrot.lane.b32.xlu0 %v498, 32
      %v584 = vpop.permute.xlu0 %583
      %585 = vrot.lane.b32.xlu0 %v397, 32
      %v586 = vpop.permute.xlu0 %585
      %vm595 = vcmask 31744
      %v596 = vsel %vm595, 0.0, %v372
      %v597 = vsel %vm595, %v316, %v374
      %v598 = vsel %vm595, %v317, %v376
      %v599 = vsel %vm595, %v318, %v378
      %v600 = vsel %vm595, %v319, %v380
      %v601 = vsel %vm595, %v320, %v382
      %v602 = vsel %vm595, %v321, %v384
      %v603 = vsel %vm595, %v322, %v386
      %vm604 = vcmask 64512
      %v605 = vsel %vm604, %v596, %v420
      %v606 = vsel %vm604, %v597, %v422
      %v607 = vsel %vm604, %v598, %v424
      %v608 = vsel %vm604, %v599, %v426
      %v609 = vsel %vm604, %v600, %v428
      %v610 = vsel %vm604, %v601, %v430
      %v611 = vsel %vm604, %v602, %v432
      %v612 = vsel %vm604, %v603, %v434
      %vm613 = vcmask 97280
      %v614 = vsel %vm613, %v605, %v445
      %v615 = vsel %vm613, %v606, %v447
      %v616 = vsel %vm613, %v607, %v449
      %v617 = vsel %vm613, %v608, %v451
      %v618 = vsel %vm613, %v609, %v453
      %v619 = vsel %vm613, %v610, %v455
      %v620 = vsel %vm613, %v611, %v457
      %v621 = vsel %vm613, %v612, %v459
      %vm622 = vcmask 130048
      %v623 = vsel %vm622, %v614, %v473
      %v624 = vsel %vm622, %v615, %v475
      %v625 = vsel %vm622, %v616, %v477
      %v626 = vsel %vm622, %v617, %v479
      %v627 = vsel %vm622, %v618, %v481
      %v628 = vsel %vm622, %v619, %v483
      %v629 = vsel %vm622, %v620, %v485
      %v630 = vsel %vm622, %v621, %v487
      %vm631 = vcmask 162816
      %v632 = vsel %vm631, %v623, %v500
      %v633 = vsel %vm631, %v624, %v502
      %v634 = vsel %vm631, %v625, %v504
      %v635 = vsel %vm631, %v626, %v506
      %v636 = vsel %vm631, %v627, %v508
      %v637 = vsel %vm631, %v628, %v510
      %v638 = vsel %vm631, %v629, %v512
      %v639 = vsel %vm631, %v630, %v514
      %vm640 = vcmask 195584
      %v641 = vsel %vm640, %v632, %v524
      %v642 = vsel %vm640, %v633, %v526
      %v643 = vsel %vm640, %v634, %v528
      %v644 = vsel %vm640, %v635, %v530
      %v645 = vsel %vm640, %v636, %v532
      %v646 = vsel %vm640, %v637, %v534
      %v647 = vsel %vm640, %v638, %v536
      %v648 = vsel %vm640, %v639, %v538
      %vm649 = vcmask 228352
      %v650 = vsel %vm649, %v641, %v548
      %v651 = vsel %vm649, %v642, %v550
      %v652 = vsel %vm649, %v643, %v552
      %v653 = vsel %vm649, %v644, %v554
      %v654 = vsel %vm649, %v645, %v556
      %v655 = vsel %vm649, %v646, %v558
      %v656 = vsel %vm649, %v647, %v560
      %v657 = vsel %vm649, %v648, %v562
      %vm658 = vcmask 261120
      %v659 = vsel %vm658, %v650, %v572
      %v660 = vsel %vm658, %v651, %v574
      %v661 = vsel %vm658, %v652, %v576
      %v662 = vsel %vm658, %v653, %v578
      %v663 = vsel %vm658, %v654, %v580
      %v664 = vsel %vm658, %v655, %v582
      %v665 = vsel %vm658, %v656, %v584
      %v666 = vsel %vm658, %v657, %v586
      %v667 = vld [vmem:[%s1] sm:$0xff]
      %v668 = vld [vmem:[%s1 + $0x8] sm:$0xff]
      %v669 = vld [vmem:[%s1 + $0x10] sm:$0xff]
      %v670 = vld [vmem:[%s1 + $0x18] sm:$0xff]
      %v671 = vld [vmem:[%s1 + $0x20] sm:$0xf]
      %v672 = vld [vmem:[%s2] sm:$0x1]
      %v674 = vperm.slane %v672, 0
      %vm676 = vcmask 293888
      %v678 = vsel %vm676, %v659, 0
      %v681 = vsel %vm676, %v660, 0
      %v684 = vsel %vm676, %v661, 0
      %v687 = vsel %vm676, %v662, 0
      %v690 = vsel %vm676, %v663, 0
      %v693 = vsel %vm676, %v664, 0
      %v696 = vsel %vm676, %v665, 0
      %v699 = vsel %vm676, %v666, 0
      %vm701 = vcmask 1043456
      %v703 = vsel %vm701, %v671, 0
      %705 = vmatpush.msra.mxu0 0.0
      %706 = vmatpush.msra.mxu0 0.0
      %707 = vmatpush.msra.mxu0 0.0
      %708 = vmatpush.msra.mxu0 0.0
      %709 = vmatpush.msra.mxu0 0.0
      %710 = vmatpush.msra.mxu0 0.0
      %711 = vmatpush.msra.mxu0 0.0
      %712 = vmatpush.msra.mxu0 0.0
      %713 = vmatpush.msra.mxu0 0.0
      %714 = vmatpush.msra.mxu0 0.0
      %715 = vmatpush.msra.mxu0 0.0
      %716 = vmatpush.msra.mxu0 %v703
      %717 = vmatpush.msra.mxu0 %v670
      %718 = vmatpush.msra.mxu0 %v669
      %719 = vmatpush.msra.mxu0 %v668
      %720 = vmatpush.msra.mxu0 %v667
      %721 = vmatmul.f32.gmra.mxu0 %v678
      %v722 = vpop.f32.mrf.mxu0
      %v723 = vadd.f32 %v674, %v722
      %724 = vmatmul.f32.gmra.mxu0 %v681
      %v725 = vpop.f32.mrf.mxu0
      %v726 = vadd.f32 %v674, %v725
      %727 = vmatmul.f32.gmra.mxu0 %v684
      %v728 = vpop.f32.mrf.mxu0
      %v729 = vadd.f32 %v674, %v728
      %730 = vmatmul.f32.gmra.mxu0 %v687
      %v731 = vpop.f32.mrf.mxu0
      %v732 = vadd.f32 %v674, %v731
      %733 = vmatmul.f32.gmra.mxu0 %v690
      %v734 = vpop.f32.mrf.mxu0
      %v735 = vadd.f32 %v674, %v734
      %736 = vmatmul.f32.gmra.mxu0 %v693
      %v737 = vpop.f32.mrf.mxu0
      %v738 = vadd.f32 %v674, %v737
      %739 = vmatmul.f32.gmra.mxu0 %v696
      %v740 = vpop.f32.mrf.mxu0
      %v741 = vadd.f32 %v674, %v740
      %742 = vmatmul.f32.gmra.mxu0 %v699
      %v743 = vpop.f32.mrf.mxu0
      %v744 = vadd.f32 %v674, %v743
      %745 = vdwg.mxu0
      %v746 = vmax.f32 %v723, 0.0
      %v747 = vmax.f32 %v726, 0.0
      %v748 = vmax.f32 %v729, 0.0
      %v749 = vmax.f32 %v732, 0.0
      %v750 = vmax.f32 %v735, 0.0
      %v751 = vmax.f32 %v738, 0.0
      %v752 = vmax.f32 %v741, 0.0
      %v753 = vmax.f32 %v744, 0.0
      %v762 = vrot.slane %v746, 7
      %v763 = vrot.slane %v747, 7
      %v764 = vrot.slane %v748, 7
      %v765 = vrot.slane %v749, 7
      %v766 = vrot.slane %v750, 7
      %v767 = vrot.slane %v751, 7
      %v768 = vrot.slane %v752, 7
      %v769 = vrot.slane %v753, 7
      %v778 = vsel %vm315, 0.0, %v762
      %v779 = vsel %vm315, 0.0, %v763
      %v780 = vsel %vm315, 0.0, %v764
      %v781 = vsel %vm315, 0.0, %v765
      %v782 = vsel %vm315, 0.0, %v766
      %v783 = vsel %vm315, 0.0, %v767
      %v784 = vsel %vm315, 0.0, %v768
      %v785 = vsel %vm315, 0.0, %v769
      %v786 = vsel %vm315, %v762, 0.0
      %v787 = vsel %vm315, %v763, 0.0
      %v788 = vsel %vm315, %v764, 0.0
      %v789 = vsel %vm315, %v765, 0.0
      %v790 = vsel %vm315, %v766, 0.0
      %v791 = vsel %vm315, %v767, 0.0
      %v792 = vsel %vm315, %v768, 0.0
      %v793 = vsel %vm315, %v769, 0.0
      %v808 = vrot.slane %v778, 1
      %v809 = vrot.slane %v786, 1
      %v810 = vsel %vm347, %v808, %v809
      %v811 = vrot.slane %v779, 1
      %v812 = vrot.slane %v787, 1
      %v813 = vsel %vm347, %v811, %v812
      %v814 = vrot.slane %v780, 1
      %v815 = vrot.slane %v788, 1
      %v816 = vsel %vm347, %v814, %v815
      %v817 = vrot.slane %v781, 1
      %v818 = vrot.slane %v789, 1
      %v819 = vsel %vm347, %v817, %v818
      %v820 = vrot.slane %v782, 1
      %v821 = vrot.slane %v790, 1
      %v822 = vsel %vm347, %v820, %v821
      %v823 = vrot.slane %v783, 1
      %v824 = vrot.slane %v791, 1
      %v825 = vsel %vm347, %v823, %v824
      %v826 = vrot.slane %v784, 1
      %v827 = vrot.slane %v792, 1
      %v828 = vsel %vm347, %v826, %v827
      %829 = vrot.lane.b32.xlu0 %v349, 8
      %v830 = vpop.permute.xlu0 %829
      %831 = vrot.lane.b32.xlu0 %v810, 8
      %v832 = vpop.permute.xlu0 %831
      %833 = vrot.lane.b32.xlu0 %v813, 8
      %v834 = vpop.permute.xlu0 %833
      %835 = vrot.lane.b32.xlu0 %v816, 8
      %v836 = vpop.permute.xlu0 %835
      %837 = vrot.lane.b32.xlu0 %v819, 8
      %v838 = vpop.permute.xlu0 %837
      %839 = vrot.lane.b32.xlu0 %v822, 8
      %v840 = vpop.permute.xlu0 %839
      %841 = vrot.lane.b32.xlu0 %v825, 8
      %v842 = vpop.permute.xlu0 %841
      %843 = vrot.lane.b32.xlu0 %v828, 8
      %v844 = vpop.permute.xlu0 %843
      %v853 = vrot.slane %v778, 2
      %v854 = vrot.slane %v786, 2
      %v855 = vsel %vm395, %v853, %v854
      %v856 = vrot.slane %v779, 2
      %v857 = vrot.slane %v787, 2
      %v858 = vsel %vm395, %v856, %v857
      %v859 = vrot.slane %v780, 2
      %v860 = vrot.slane %v788, 2
      %v861 = vsel %vm395, %v859, %v860
      %v862 = vrot.slane %v781, 2
      %v863 = vrot.slane %v789, 2
      %v864 = vsel %vm395, %v862, %v863
      %v865 = vrot.slane %v782, 2
      %v866 = vrot.slane %v790, 2
      %v867 = vsel %vm395, %v865, %v866
      %v868 = vrot.slane %v783, 2
      %v869 = vrot.slane %v791, 2
      %v870 = vsel %vm395, %v868, %v869
      %v871 = vrot.slane %v784, 2
      %v872 = vrot.slane %v792, 2
      %v873 = vsel %vm395, %v871, %v872
      %874 = vrot.lane.b32.xlu0 %v397, 16
      %v875 = vpop.permute.xlu0 %874
      %876 = vrot.lane.b32.xlu0 %v855, 16
      %v877 = vpop.permute.xlu0 %876
      %878 = vrot.lane.b32.xlu0 %v858, 16
      %v879 = vpop.permute.xlu0 %878
      %880 = vrot.lane.b32.xlu0 %v861, 16
      %v881 = vpop.permute.xlu0 %880
      %882 = vrot.lane.b32.xlu0 %v864, 16
      %v883 = vpop.permute.xlu0 %882
      %884 = vrot.lane.b32.xlu0 %v867, 16
      %v885 = vpop.permute.xlu0 %884
      %886 = vrot.lane.b32.xlu0 %v870, 16
      %v887 = vpop.permute.xlu0 %886
      %888 = vrot.lane.b32.xlu0 %v873, 16
      %v889 = vpop.permute.xlu0 %888
      %899 = vrot.lane.b32.xlu0 %v778, 24
      %v900 = vpop.permute.xlu0 %899
      %901 = vrot.lane.b32.xlu0 %v779, 24
      %v902 = vpop.permute.xlu0 %901
      %903 = vrot.lane.b32.xlu0 %v780, 24
      %v904 = vpop.permute.xlu0 %903
      %905 = vrot.lane.b32.xlu0 %v781, 24
      %v906 = vpop.permute.xlu0 %905
      %907 = vrot.lane.b32.xlu0 %v782, 24
      %v908 = vpop.permute.xlu0 %907
      %909 = vrot.lane.b32.xlu0 %v783, 24
      %v910 = vpop.permute.xlu0 %909
      %911 = vrot.lane.b32.xlu0 %v784, 24
      %v912 = vpop.permute.xlu0 %911
      %913 = vrot.lane.b32.xlu0 %v785, 24
      %v914 = vpop.permute.xlu0 %913
      %v924 = vrot.slane %v785, 1
      %v925 = vrot.slane %v793, 1
      %v926 = vsel %vm347, %v924, %v925
      %927 = vrot.lane.b32.xlu0 %v810, 32
      %v928 = vpop.permute.xlu0 %927
      %929 = vrot.lane.b32.xlu0 %v813, 32
      %v930 = vpop.permute.xlu0 %929
      %931 = vrot.lane.b32.xlu0 %v816, 32
      %v932 = vpop.permute.xlu0 %931
      %933 = vrot.lane.b32.xlu0 %v819, 32
      %v934 = vpop.permute.xlu0 %933
      %935 = vrot.lane.b32.xlu0 %v822, 32
      %v936 = vpop.permute.xlu0 %935
      %937 = vrot.lane.b32.xlu0 %v825, 32
      %v938 = vpop.permute.xlu0 %937
      %939 = vrot.lane.b32.xlu0 %v828, 32
      %v940 = vpop.permute.xlu0 %939
      %941 = vrot.lane.b32.xlu0 %v926, 32
      %v942 = vpop.permute.xlu0 %941
      %v951 = vrot.slane %v785, 2
      %v952 = vrot.slane %v793, 2
      %v953 = vsel %vm395, %v951, %v952
      %954 = vrot.lane.b32.xlu0 %v855, 40
      %v955 = vpop.permute.xlu0 %954
      %956 = vrot.lane.b32.xlu0 %v858, 40
      %v957 = vpop.permute.xlu0 %956
      %958 = vrot.lane.b32.xlu0 %v861, 40
      %v959 = vpop.permute.xlu0 %958
      %960 = vrot.lane.b32.xlu0 %v864, 40
      %v961 = vpop.permute.xlu0 %960
      %962 = vrot.lane.b32.xlu0 %v867, 40
      %v963 = vpop.permute.xlu0 %962
      %964 = vrot.lane.b32.xlu0 %v870, 40
      %v965 = vpop.permute.xlu0 %964
      %966 = vrot.lane.b32.xlu0 %v873, 40
      %v967 = vpop.permute.xlu0 %966
      %968 = vrot.lane.b32.xlu0 %v953, 40
      %v969 = vpop.permute.xlu0 %968
      %978 = vrot.lane.b32.xlu0 %v779, 48
      %v979 = vpop.permute.xlu0 %978
      %980 = vrot.lane.b32.xlu0 %v780, 48
      %v981 = vpop.permute.xlu0 %980
      %982 = vrot.lane.b32.xlu0 %v781, 48
      %v983 = vpop.permute.xlu0 %982
      %984 = vrot.lane.b32.xlu0 %v782, 48
      %v985 = vpop.permute.xlu0 %984
      %986 = vrot.lane.b32.xlu0 %v783, 48
      %v987 = vpop.permute.xlu0 %986
      %988 = vrot.lane.b32.xlu0 %v784, 48
      %v989 = vpop.permute.xlu0 %988
      %990 = vrot.lane.b32.xlu0 %v785, 48
      %v991 = vpop.permute.xlu0 %990
      %992 = vrot.lane.b32.xlu0 0.0, 48
      %v993 = vpop.permute.xlu0 %992
      %1002 = vrot.lane.b32.xlu0 %v813, 56
      %v1003 = vpop.permute.xlu0 %1002
      %1004 = vrot.lane.b32.xlu0 %v816, 56
      %v1005 = vpop.permute.xlu0 %1004
      %1006 = vrot.lane.b32.xlu0 %v819, 56
      %v1007 = vpop.permute.xlu0 %1006
      %1008 = vrot.lane.b32.xlu0 %v822, 56
      %v1009 = vpop.permute.xlu0 %1008
      %1010 = vrot.lane.b32.xlu0 %v825, 56
      %v1011 = vpop.permute.xlu0 %1010
      %1012 = vrot.lane.b32.xlu0 %v828, 56
      %v1013 = vpop.permute.xlu0 %1012
      %1014 = vrot.lane.b32.xlu0 %v926, 56
      %v1015 = vpop.permute.xlu0 %1014
      %1016 = vrot.lane.b32.xlu0 %v349, 56
      %v1017 = vpop.permute.xlu0 %1016
      %1026 = vrot.lane.b32.xlu0 %v858, 64
      %v1027 = vpop.permute.xlu0 %1026
      %1028 = vrot.lane.b32.xlu0 %v861, 64
      %v1029 = vpop.permute.xlu0 %1028
      %1030 = vrot.lane.b32.xlu0 %v864, 64
      %v1031 = vpop.permute.xlu0 %1030
      %1032 = vrot.lane.b32.xlu0 %v867, 64
      %v1033 = vpop.permute.xlu0 %1032
      %1034 = vrot.lane.b32.xlu0 %v870, 64
      %v1035 = vpop.permute.xlu0 %1034
      %1036 = vrot.lane.b32.xlu0 %v873, 64
      %v1037 = vpop.permute.xlu0 %1036
      %1038 = vrot.lane.b32.xlu0 %v953, 64
      %v1039 = vpop.permute.xlu0 %1038
      %1040 = vrot.lane.b32.xlu0 %v397, 64
      %v1041 = vpop.permute.xlu0 %1040
      %v1050 = vsel %vm604, 0.0, %v830
      %v1051 = vsel %vm604, %v778, %v832
      %v1052 = vsel %vm604, %v779, %v834
      %v1053 = vsel %vm604, %v780, %v836
      %v1054 = vsel %vm604, %v781, %v838
      %v1055 = vsel %vm604, %v782, %v840
      %v1056 = vsel %vm604, %v783, %v842
      %v1057 = vsel %vm604, %v784, %v844
      %v1058 = vsel %vm622, %v1050, %v875
      %v1059 = vsel %vm622, %v1051, %v877
      %v1060 = vsel %vm622, %v1052, %v879
      %v1061 = vsel %vm622, %v1053, %v881
      %v1062 = vsel %vm622, %v1054, %v883
      %v1063 = vsel %vm622, %v1055, %v885
      %v1064 = vsel %vm622, %v1056, %v887
      %v1065 = vsel %vm622, %v1057, %v889
      %v1066 = vsel %vm640, %v1058, %v900
      %v1067 = vsel %vm640, %v1059, %v902
      %v1068 = vsel %vm640, %v1060, %v904
      %v1069 = vsel %vm640, %v1061, %v906
      %v1070 = vsel %vm640, %v1062, %v908
      %v1071 = vsel %vm640, %v1063, %v910
      %v1072 = vsel %vm640, %v1064, %v912
      %v1073 = vsel %vm640, %v1065, %v914
      %v1074 = vsel %vm658, %v1066, %v928
      %v1075 = vsel %vm658, %v1067, %v930
      %v1076 = vsel %vm658, %v1068, %v932
      %v1077 = vsel %vm658, %v1069, %v934
      %v1078 = vsel %vm658, %v1070, %v936
      %v1079 = vsel %vm658, %v1071, %v938
      %v1080 = vsel %vm658, %v1072, %v940
      %v1081 = vsel %vm658, %v1073, %v942
      %vm1082 = vcmask 326656
      %v1083 = vsel %vm1082, %v1074, %v955
      %v1084 = vsel %vm1082, %v1075, %v957
      %v1085 = vsel %vm1082, %v1076, %v959
      %v1086 = vsel %vm1082, %v1077, %v961
      %v1087 = vsel %vm1082, %v1078, %v963
      %v1088 = vsel %vm1082, %v1079, %v965
      %v1089 = vsel %vm1082, %v1080, %v967
      %v1090 = vsel %vm1082, %v1081, %v969
      %vm1091 = vcmask 392192
      %v1092 = vsel %vm1091, %v1083, %v979
      %v1093 = vsel %vm1091, %v1084, %v981
      %v1094 = vsel %vm1091, %v1085, %v983
      %v1095 = vsel %vm1091, %v1086, %v985
      %v1096 = vsel %vm1091, %v1087, %v987
      %v1097 = vsel %vm1091, %v1088, %v989
      %v1098 = vsel %vm1091, %v1089, %v991
      %v1099 = vsel %vm1091, %v1090, %v993
      %vm1100 = vcmask 457728
      %v1101 = vsel %vm1100, %v1092, %v1003
      %v1102 = vsel %vm1100, %v1093, %v1005
      %v1103 = vsel %vm1100, %v1094, %v1007
      %v1104 = vsel %vm1100, %v1095, %v1009
      %v1105 = vsel %vm1100, %v1096, %v1011
      %v1106 = vsel %vm1100, %v1097, %v1013
      %v1107 = vsel %vm1100, %v1098, %v1015
      %v1108 = vsel %vm1100, %v1099, %v1017
      %vm1109 = vcmask 523264
      %v1110 = vsel %vm1109, %v1101, %v1027
      %v1111 = vsel %vm1109, %v1102, %v1029
      %v1112 = vsel %vm1109, %v1103, %v1031
      %v1113 = vsel %vm1109, %v1104, %v1033
      %v1114 = vsel %vm1109, %v1105, %v1035
      %v1115 = vsel %vm1109, %v1106, %v1037
      %v1116 = vsel %vm1109, %v1107, %v1039
      %v1117 = vsel %vm1109, %v1108, %v1041
      %v1118 = vld [vmem:[%s3] sm:$0xff]
      %v1119 = vld [vmem:[%s3 + $0x8] sm:$0xff]
      %v1120 = vld [vmem:[%s3 + $0x10] sm:$0xff]
      %v1121 = vld [vmem:[%s3 + $0x18] sm:$0xff]
      %v1122 = vld [vmem:[%s3 + $0x20] sm:$0xff]
      %v1123 = vld [vmem:[%s3 + $0x28] sm:$0xff]
      %v1124 = vld [vmem:[%s3 + $0x30] sm:$0xff]
      %v1125 = vld [vmem:[%s3 + $0x38] sm:$0xff]
      %v1126 = vld [vmem:[%s3 + $0x40] sm:$0xff]
      %v1127 = vld [vmem:[%s4] sm:$0x1]
      %v1129 = vperm.slane %v1127, 0
      %vm1131 = vcmask 588800
      %v1133 = vsel %vm1131, %v1110, 0
      %v1136 = vsel %vm1131, %v1111, 0
      %v1139 = vsel %vm1131, %v1112, 0
      %v1142 = vsel %vm1131, %v1113, 0
      %v1145 = vsel %vm1131, %v1114, 0
      %v1148 = vsel %vm1131, %v1115, 0
      %v1151 = vsel %vm1131, %v1116, 0
      %v1154 = vsel %vm1131, %v1117, 0
      %1156 = vmatpush.msra.mxu0 0.0
      %1157 = vmatpush.msra.mxu0 0.0
      %1158 = vmatpush.msra.mxu0 0.0
      %1159 = vmatpush.msra.mxu0 0.0
      %1160 = vmatpush.msra.mxu0 0.0
      %1161 = vmatpush.msra.mxu0 0.0
      %1162 = vmatpush.msra.mxu0 0.0
      %1163 = vmatpush.msra.mxu0 %v1126
      %1164 = vmatpush.msra.mxu0 %v1125
      %1165 = vmatpush.msra.mxu0 %v1124
      %1166 = vmatpush.msra.mxu0 %v1123
      %1167 = vmatpush.msra.mxu0 %v1122
      %1168 = vmatpush.msra.mxu0 %v1121
      %1169 = vmatpush.msra.mxu0 %v1120
      %1170 = vmatpush.msra.mxu0 %v1119
      %1171 = vmatpush.msra.mxu0 %v1118
      %1172 = vmatmul.f32.gmra.mxu0 %v1133
      %v1173 = vpop.f32.mrf.mxu0
      %v1174 = vadd.f32 %v1129, %v1173
      %1175 = vmatmul.f32.gmra.mxu0 %v1136
      %v1176 = vpop.f32.mrf.mxu0
      %v1177 = vadd.f32 %v1129, %v1176
      %1178 = vmatmul.f32.gmra.mxu0 %v1139
      %v1179 = vpop.f32.mrf.mxu0
      %v1180 = vadd.f32 %v1129, %v1179
      %1181 = vmatmul.f32.gmra.mxu0 %v1142
      %v1182 = vpop.f32.mrf.mxu0
      %v1183 = vadd.f32 %v1129, %v1182
      %1184 = vmatmul.f32.gmra.mxu0 %v1145
      %v1185 = vpop.f32.mrf.mxu0
      %v1186 = vadd.f32 %v1129, %v1185
      %1187 = vmatmul.f32.gmra.mxu0 %v1148
      %v1188 = vpop.f32.mrf.mxu0
      %v1189 = vadd.f32 %v1129, %v1188
      %1190 = vmatmul.f32.gmra.mxu0 %v1151
      %v1191 = vpop.f32.mrf.mxu0
      %v1192 = vadd.f32 %v1129, %v1191
      %1193 = vmatmul.f32.gmra.mxu0 %v1154
      %v1194 = vpop.f32.mrf.mxu0
      %v1195 = vadd.f32 %v1129, %v1194
      %1196 = vdwg.mxu0
      %v1197 = vmax.f32 %v1174, 0.0
      %v1198 = vmax.f32 %v1177, 0.0
      %v1199 = vmax.f32 %v1180, 0.0
      %v1200 = vmax.f32 %v1183, 0.0
      %v1201 = vmax.f32 %v1186, 0.0
      %v1202 = vmax.f32 %v1189, 0.0
      %v1203 = vmax.f32 %v1192, 0.0
      %v1204 = vmax.f32 %v1195, 0.0
      %1205 = vst.msk [vmem:[%s224] sm:$0xff] %vm604, %v1197
      %1206 = vst.msk [vmem:[%s224 + $0x8] sm:$0xff] %vm604, %v1198
      %1207 = vst.msk [vmem:[%s224 + $0x10] sm:$0xff] %vm604, %v1199
      %1208 = vst.msk [vmem:[%s224 + $0x18] sm:$0xff] %vm604, %v1200
      %1209 = vst.msk [vmem:[%s224 + $0x20] sm:$0xff] %vm604, %v1201
      %1210 = vst.msk [vmem:[%s224 + $0x28] sm:$0xff] %vm604, %v1202
      %1211 = vst.msk [vmem:[%s224 + $0x30] sm:$0xff] %vm604, %v1203
      %1212 = vst.msk [vmem:[%s224 + $0x38] sm:$0xff] %vm604, %v1204
      %s1213 = smul.u32 8, %s16
      %p1214 = scmp.lt.s32.totalorder %s1213, 15
      %s1215 = scalar_select %p1214, %s1213, 15
      %s1216 = smul.addr %s1215, 8
      %s1217 = scalar_lea.vmem %s5, %s1216
      // Predicated region
      $region41: #{unet_down_forward.1} parent=39 // pred_check
        %p1218 = pneg %p144
      $region42: #{unet_down_forward.1} parent=39 // pred_check_branch
        %1220 = sbr.rel (%p1218) target = $region44
      $region43: #{unet_down_forward.1} parent=39 // pred_region
        %s1221 = smul.u32 8, %s16
      $region44: #{unet_down_forward.1} parent=39 // pred_fallthru
        _
    $region40: #{unet_down_forward.1} parent=5 // pred_fallthru
      _
    %p1222 = scmp.le.s32.totalorder 2, %s11
    // Predicated region
    $region45: #{unet_down_forward.1} parent=5 // pred_check
      %p1223 = pneg %p1222
    $region46: #{unet_down_forward.1} parent=5 // pred_check_branch
      %1225 = sbr.rel (%p1223) target = $region48
    $region47: #{unet_down_forward.1} parent=5 // pred_region
      %s1226 = ssub.s32 %s11, 2
      // Predicated region
      $region49: #{unet_down_forward.1} parent=47 // pred_check
        %p1227 = pneg %p150
      $region50: #{unet_down_forward.1} parent=47 // pred_check_branch
        %1229 = sbr.rel (%p1227) target = $region52
      $region51: #{unet_down_forward.1} parent=47 // pred_region
        %s1230 = smul.u32 8, %s17
        %p1231 = scmp.lt.s32.totalorder %s1230, 15
        %s1232 = scalar_select %p1231, %s1230, 15
        %s1233 = smul.addr %s1232, 8
        %s1234 = scalar_lea.vmem %s5, %s1233
      $region52: #{unet_down_forward.1} parent=47 // pred_fallthru
        _
    $region48: #{unet_down_forward.1} parent=5 // pred_fallthru
      _
  $region6: #{unet_down_forward.1} parent=0 // loop_footer
    %s15 = sadd.s32 1, %s11
  $region7: #{unet_down_forward.1} parent=0 // loop_footer_branch
    %10 = sbr.rel target = $region3
  $region8: #{unet_down_forward.1} parent=0 // loop_exit
    _

</llo_original>
